<compile_context>
chip_gen: v6e
topology: v6e:2x2x1
jax: 0.10.0
libtpu: 0.0.40
codegen_flags: <defaults>
</compile_context>

<pallas_src>
import math

import jax
import jax.numpy as jnp
import numpy as np
from jax.experimental import pallas as pl
from jax.experimental.pallas import tpu as pltpu


_CH = 32          # output canvas rows (>= 26 valid rows, multiple of 8 sublanes)
_CW = 128         # canvas lanes (lane-dense)
_POOL_ROWS = 24   # -inf-padded pool-source scratch rows
_CONV_ROWS = 40   # zero-padded conv2-source scratch rows


def _model1_kernel(x_ref, p_ref, out_ref, pool_ref, conv_ref):
    """Fused conv1 -> maxpool(-inf pad) -> conv2(zero pad, mean-folded).

    x_ref   : (3, 8, 128) f32 VMEM -- stride-2 subsampled input; plane ci holds
                                      channel ci replicated into lanes
                                      [0:8), [32:40), [64:72); zeros elsewhere.
    p_ref   : (16, 128)   f32 VMEM -- lane-varying parameter planes:
                rows 0..2 : conv1 weight plane for input channel ci (w1[g, ci])
                row  3    : conv1 bias plane                         (b1[g])
                rows 4..12: conv2 (mean-folded) weight plane for tap 3*kh+kw
                row  13   : conv2 (mean-folded) bias, lanes [0,32) only
    out_ref : (32, 128)   f32 VMEM -- result, valid in [:26, :26]
    pool_ref: (24, 128)   f32 VMEM scratch (pool source, -inf padded)
    conv_ref: (40, 128)   f32 VMEM scratch (conv2 source, zero padded)

    Lane layout: input channel c occupies lane group [32c, 32c+32); lanes
    [96,128) are padding.  All shifts are arranged so that roll wrap-around and
    cross-group bleed only ever land on padding values (-inf for the pool,
    0 for conv2), so the tap loops need no masks at all.
    """
    neg_inf = jnp.float32(-jnp.inf)

    # ---- lane-group validity masks (built exactly once) ---------------------
    lane16 = jax.lax.broadcasted_iota(jnp.int32, (16, _CW), 1)
    lane8 = lane16[:8]
    vmask = (jnp.bitwise_and(lane8, 31) < 8) & (lane8 < 96)      # conv1 valid 8x8
    mmask = (jnp.bitwise_and(lane16, 31) < 16) & (lane16 < 96)   # pool  valid 16x16

    # ---- conv1: 1x1 stride-2 conv == per-lane-group channel mix (+ bias) ----
    v = (p_ref[pl.ds(0, 1), :] * x_ref[0]
         + p_ref[pl.ds(1, 1), :] * x_ref[1]
         + p_ref[pl.ds(2, 1), :] * x_ref[2]
         + p_ref[pl.ds(3, 1), :])                                 # (8, 128)
    # -inf outside the valid 8x8 region so pool padding is implicit below.
    v = jnp.where(vmask, v, neg_inf)

    # ---- max_pool2d(k=3, s=1, pad=5) with implicit -inf padding --------------
    #   pooled[r, q] = max_{kh,kw} v[r+kh-5, q+kw-5]   (-inf out of range)
    # Row shifts = shifted reads from the -inf-filled scratch (no sublane rolls,
    # no row masks); column shifts = lane rolls whose wrap/bleed lands on -inf.
    pool_ref[...] = jnp.full((_POOL_ROWS, _CW), neg_inf, jnp.float32)
    pool_ref[pl.ds(8, 8), :] = v                 # v row i -> scratch row 8 + i
    m = None
    for kh in range(3):
        rows = pool_ref[pl.ds(3 + kh, 16), :]    # rows[r] = v[r + kh - 5]
        for kw in range(3):
            tap = pltpu.roll(rows, 5 - kw, axis=1)   # tap[r,q] = v[r+kh-5, q+kw-5]
            m = tap if m is None else jnp.maximum(m, tap)

    # ---- conv2 (3x3, zero padding 6), output channels pre-folded by mean -----
    #   acc[r, 32c+q] += w_eff[c,kh,kw] * m_c[r+kh-6, q+kw-6]   (0 outside)
    m_z = jnp.where(mmask, m, 0.0)               # zero pad outside valid 16x16
    conv_ref[...] = jnp.zeros((_CONV_ROWS, _CW), jnp.float32)
    conv_ref[pl.ds(8, 16), :] = m_z              # m row i -> scratch row 8 + i

    # Accumulator starts at the mean-folded conv2 bias (group-0 lanes only, so
    # the cross-group reduction below adds it exactly once).
    acc = jnp.broadcast_to(p_ref[pl.ds(13, 1), :], (_CH, _CW))
    for kh in range(3):
        rows = conv_ref[pl.ds(2 + kh, 32), :]    # rows[r] = m[r + kh - 6]
        for kw in range(3):
            tap = pltpu.roll(rows, 6 - kw, axis=1)   # tap[r,q] = m[r+kh-6, q+kw-6]
            acc = acc + p_ref[pl.ds(4 + kh * 3 + kw, 1), :] * tap

    # ---- reduce the 3 input-channel lane groups into lanes [0, 32) ----------
    out = acc + pltpu.roll(acc, 96, axis=1) + pltpu.roll(acc, 64, axis=1)
    out_ref[...] = out                           # full lane-dense (32,128) store


def _lane_plane(c0, c1, c2, pad=0.0):
    """(128,) plane: value ck on lanes [32k, 32k+32), `pad` on lanes [96,128)."""
    vals = jnp.stack([jnp.asarray(c0, jnp.float32), jnp.asarray(c1, jnp.float32),
                      jnp.asarray(c2, jnp.float32), jnp.asarray(pad, jnp.float32)])
    return jnp.repeat(vals, 32)


def prepare_params(w1, b1, w2, b2):
    """Pack lane-varying parameter planes (folds the channel mean into conv2)."""
    w1f = w1[:, :, 0, 0]                    # (co, ci)
    w2_eff = jnp.mean(w2, axis=0)           # (ci, kh, kw) -- mean over out channels
    b2_eff = jnp.mean(b2)
    rows = [_lane_plane(w1f[0, ci], w1f[1, ci], w1f[2, ci]) for ci in range(3)]
    rows.append(_lane_plane(b1[0], b1[1], b1[2]))
    rows += [_lane_plane(w2_eff[0, kh, kw], w2_eff[1, kh, kw], w2_eff[2, kh, kw])
             for kh in range(3) for kw in range(3)]
    rows.append(_lane_plane(b2_eff, 0.0, 0.0))    # conv2 bias, group 0 only
    rows += [jnp.zeros((128,), jnp.float32)] * (16 - len(rows))
    return jnp.stack(rows).astype(jnp.float32)    # (16, 128)


@jax.jit
def _model1_forward_jit(x1, planes):
    # conv1 stride-2 subsample + channel replication into the 3 lane groups.
    # Pure layout plumbing (<12 KiB) that fuses into the same executable.
    xs = x1[0, :, ::2, ::2].astype(jnp.float32)          # (3, 8, 8)
    xrep = jnp.zeros((3, 8, _CW), jnp.float32)
    xrep = xrep.at[:, :, 0:8].set(xs)
    xrep = xrep.at[:, :, 32:40].set(xs)
    xrep = xrep.at[:, :, 64:72].set(xs)

    out = pl.pallas_call(
        _model1_kernel,
        out_shape=jax.ShapeDtypeStruct((_CH, _CW), jnp.float32),
        in_specs=[
            pl.BlockSpec(memory_space=pltpu.MemorySpace.VMEM),
            pl.BlockSpec(memory_space=pltpu.MemorySpace.VMEM),
        ],
        out_specs=pl.BlockSpec(memory_space=pltpu.MemorySpace.VMEM),
        scratch_shapes=[
            pltpu.VMEM((_POOL_ROWS, _CW), jnp.float32),
            pltpu.VMEM((_CONV_ROWS, _CW), jnp.float32),
        ],
    )(xrep, planes)

    return out[:26, :26].reshape(1, 1, 26, 26)           # NCHW, keepdim=True mean


def model1_forward(x1, x2=None, other1=1, other2=1, *, planes):
    """Mirrors Model1.forward; x2/other1/other2 are unused (as in the module)."""
    del x2, other1, other2
    return _model1_forward_jit(x1, planes)


def _reference_forward(x1, w1, b1, w2, b2):
    """Pure-JAX reference (same -inf-padding generalization of max_pool2d)."""
    dn = ("NCHW", "OIHW", "NCHW")
    hi = jax.lax.Precision.HIGHEST
    v1 = jax.lax.conv_general_dilated(x1, w1, (2, 2), "VALID",
                                      dimension_numbers=dn, precision=hi)
    v1 = v1 + b1.reshape(1, 3, 1, 1)
    v1p = jnp.pad(v1, ((0, 0), (0, 0), (5, 5), (5, 5)),
                  constant_values=-jnp.inf)
    v2 = jax.lax.reduce_window(v1p, -jnp.inf, jax.lax.max,
                               (1, 1, 3, 3), (1, 1, 1, 1), "VALID")
    v3 = jax.lax.conv_general_dilated(v2, w2, (1, 1), ((6, 6), (6, 6)),
                                      dimension_numbers=dn, precision=hi)
    v3 = v3 + b2.reshape(1, 5, 1, 1)
    return jnp.mean(v3, axis=1, keepdims=True)


def init_params():
    """Deterministic Conv2d-style init (uniform in +-1/sqrt(fan_in))."""
    key = jax.random.PRNGKey(0)
    k1, k2, k3, k4 = jax.random.split(key, 4)
    bound1 = 1.0 / math.sqrt(3 * 1 * 1)
    w1 = jax.random.uniform(k1, (3, 3, 1, 1), jnp.float32, -bound1, bound1)
    b1 = jax.random.uniform(k2, (3,), jnp.float32, -bound1, bound1)
    bound2 = 1.0 / math.sqrt(3 * 3 * 3)
    w2 = jax.random.uniform(k3, (5, 3, 3, 3), jnp.float32, -bound2, bound2)
    b2 = jax.random.uniform(k4, (5,), jnp.float32, -bound2, bound2)
    return w1, b1, w2, b2


if __name__ == "__main__":
    w1, b1, w2, b2 = init_params()
    planes = prepare_params(w1, b1, w2, b2)

    key = jax.random.PRNGKey(0)
    kx1, kx2 = jax.random.split(key, 2)
    x1 = jax.random.normal(kx1, (1, 3, 16, 16), jnp.float32)
    x2 = jax.random.normal(kx2, (1, 3, 16, 16), jnp.float32)  # unused by forward

    out = model1_forward(x1, x2, planes=planes)
    out = jax.block_until_ready(out)
    assert out.shape == (1, 1, 26, 26) and out.dtype == jnp.float32

    # Correctness: the finite region must match a pure-JAX reference; the
    # inf/NaN border ring comes from the (torch-invalid) padding=5 max_pool2d
    # generalization and is excluded from the comparison.
    ref = np.asarray(_reference_forward(x1, w1, b1, w2, b2))
    got = np.asarray(out)
    finite = np.isfinite(ref)
    assert finite.any()
    np.testing.assert_allclose(got[finite], ref[finite], rtol=1e-4, atol=1e-5)

    print("KERNEL_OK")
</pallas_src>

<mosaic_0001>
module attributes {stable_mosaic.version = 11 : i64} {
  func.func @_model1_kernel(%arg0: memref<3x8x128xf32, #tpu.memory_space<vmem>>, %arg1: memref<16x128xf32, #tpu.memory_space<vmem>>, %arg2: memref<32x128xf32, #tpu.memory_space<vmem>>, %arg3: memref<24x128xf32, #tpu.memory_space<vmem>>, %arg4: memref<40x128xf32, #tpu.memory_space<vmem>>) attributes {dimension_semantics = [], scalar_prefetch = 0 : i64, scratch_operands = 2 : i64, tpu.core_type = #tpu.core_type<tc>} {
    %0 = tpu.iota {dimensions = array<i32: 1>} : vector<16x128xi32>
    %1 = vector.extract_strided_slice %0 {offsets = [0, 0], sizes = [8, 128], strides = [1, 1]} : vector<16x128xi32> to vector<8x128xi32>
    %c31_i32 = arith.constant 31 : i32
    %2 = vector.broadcast %c31_i32 : i32 to vector<8x128xi32>
    %3 = arith.andi %1, %2 : vector<8x128xi32>
    %c8_i32 = arith.constant 8 : i32
    %4 = vector.broadcast %c8_i32 : i32 to vector<8x128xi32>
    %5 = arith.cmpi slt, %3, %4 : vector<8x128xi32>
    %c96_i32 = arith.constant 96 : i32
    %6 = vector.broadcast %c96_i32 : i32 to vector<8x128xi32>
    %7 = arith.cmpi slt, %1, %6 : vector<8x128xi32>
    %8 = arith.andi %5, %7 : vector<8x128xi1>
    %c31_i32_0 = arith.constant 31 : i32
    %9 = vector.broadcast %c31_i32_0 : i32 to vector<16x128xi32>
    %10 = arith.andi %0, %9 : vector<16x128xi32>
    %c16_i32 = arith.constant 16 : i32
    %11 = vector.broadcast %c16_i32 : i32 to vector<16x128xi32>
    %12 = arith.cmpi slt, %10, %11 : vector<16x128xi32>
    %c96_i32_1 = arith.constant 96 : i32
    %13 = vector.broadcast %c96_i32_1 : i32 to vector<16x128xi32>
    %14 = arith.cmpi slt, %0, %13 : vector<16x128xi32>
    %15 = arith.andi %12, %14 : vector<16x128xi1>
    %c0 = arith.constant 0 : index
    %c0_2 = arith.constant 0 : index
    %16 = vector.load %arg1[%c0, %c0_2] : memref<16x128xf32, #tpu.memory_space<vmem>>, vector<1x128xf32>
    %c0_3 = arith.constant 0 : index
    %c0_4 = arith.constant 0 : index
    %c0_5 = arith.constant 0 : index
    %17 = vector.load %arg0[%c0_3, %c0_4, %c0_5] : memref<3x8x128xf32, #tpu.memory_space<vmem>>, vector<1x8x128xf32>
    %18 = vector.shape_cast %17 : vector<1x8x128xf32> to vector<8x128xf32>
    %19 = vector.broadcast %16 : vector<1x128xf32> to vector<8x128xf32>
    %20 = arith.mulf %19, %18 : vector<8x128xf32>
    %c1 = arith.constant 1 : index
    %c0_6 = arith.constant 0 : index
    %21 = vector.load %arg1[%c1, %c0_6] : memref<16x128xf32, #tpu.memory_space<vmem>>, vector<1x128xf32>
    %c1_7 = arith.constant 1 : index
    %c0_8 = arith.constant 0 : index
    %c0_9 = arith.constant 0 : index
    %22 = vector.load %arg0[%c1_7, %c0_8, %c0_9] : memref<3x8x128xf32, #tpu.memory_space<vmem>>, vector<1x8x128xf32>
    %23 = vector.shape_cast %22 : vector<1x8x128xf32> to vector<8x128xf32>
    %24 = vector.broadcast %21 : vector<1x128xf32> to vector<8x128xf32>
    %25 = arith.mulf %24, %23 : vector<8x128xf32>
    %26 = arith.addf %20, %25 : vector<8x128xf32>
    %c2 = arith.constant 2 : index
    %c0_10 = arith.constant 0 : index
    %27 = vector.load %arg1[%c2, %c0_10] : memref<16x128xf32, #tpu.memory_space<vmem>>, vector<1x128xf32>
    %c2_11 = arith.constant 2 : index
    %c0_12 = arith.constant 0 : index
    %c0_13 = arith.constant 0 : index
    %28 = vector.load %arg0[%c2_11, %c0_12, %c0_13] : memref<3x8x128xf32, #tpu.memory_space<vmem>>, vector<1x8x128xf32>
    %29 = vector.shape_cast %28 : vector<1x8x128xf32> to vector<8x128xf32>
    %30 = vector.broadcast %27 : vector<1x128xf32> to vector<8x128xf32>
    %31 = arith.mulf %30, %29 : vector<8x128xf32>
    %32 = arith.addf %26, %31 : vector<8x128xf32>
    %c3 = arith.constant 3 : index
    %c0_14 = arith.constant 0 : index
    %33 = vector.load %arg1[%c3, %c0_14] : memref<16x128xf32, #tpu.memory_space<vmem>>, vector<1x128xf32>
    %34 = vector.broadcast %33 : vector<1x128xf32> to vector<8x128xf32>
    %35 = arith.addf %32, %34 : vector<8x128xf32>
    %cst = arith.constant 0xFF800000 : f32
    %36 = vector.broadcast %cst : f32 to vector<8x128xf32>
    %37 = arith.select %8, %35, %36 : vector<8x128xi1>, vector<8x128xf32>
    %cst_15 = arith.constant 0xFF800000 : f32
    %38 = vector.broadcast %cst_15 : f32 to vector<24x128xf32>
    %c0_16 = arith.constant 0 : index
    %c0_17 = arith.constant 0 : index
    %39 = vector.load %arg3[%c0_16, %c0_17] : memref<24x128xf32, #tpu.memory_space<vmem>>, vector<24x128xf32>
    tpu.vector_store %arg3[%c0_16, %c0_17], %38 {strides = array<i32>} : memref<24x128xf32, #tpu.memory_space<vmem>>, vector<24x128xf32>,
    %c8 = arith.constant 8 : index
    %c0_18 = arith.constant 0 : index
    %40 = vector.load %arg3[%c8, %c0_18] : memref<24x128xf32, #tpu.memory_space<vmem>>, vector<8x128xf32>
    tpu.vector_store %arg3[%c8, %c0_18], %37 {strides = array<i32>} : memref<24x128xf32, #tpu.memory_space<vmem>>, vector<8x128xf32>,
    %c3_19 = arith.constant 3 : index
    %c0_20 = arith.constant 0 : index
    %41 = vector.load %arg3[%c3_19, %c0_20] : memref<24x128xf32, #tpu.memory_space<vmem>>, vector<16x128xf32>
    %c5_i32 = arith.constant 5 : i32
    %42 = tpu.dynamic_rotate %41 by %c5_i32 dim 1 : vector<16x128xf32>, i32 -> vector<16x128xf32>
    %c4_i32 = arith.constant 4 : i32
    %43 = tpu.dynamic_rotate %41 by %c4_i32 dim 1 : vector<16x128xf32>, i32 -> vector<16x128xf32>
    %44 = arith.maximumf %42, %43 : vector<16x128xf32>
    %c3_i32 = arith.constant 3 : i32
    %45 = tpu.dynamic_rotate %41 by %c3_i32 dim 1 : vector<16x128xf32>, i32 -> vector<16x128xf32>
    %46 = arith.maximumf %44, %45 : vector<16x128xf32>
    %c4 = arith.constant 4 : index
    %c0_21 = arith.constant 0 : index
    %47 = vector.load %arg3[%c4, %c0_21] : memref<24x128xf32, #tpu.memory_space<vmem>>, vector<16x128xf32>
    %c5_i32_22 = arith.constant 5 : i32
    %48 = tpu.dynamic_rotate %47 by %c5_i32_22 dim 1 : vector<16x128xf32>, i32 -> vector<16x128xf32>
    %49 = arith.maximumf %46, %48 : vector<16x128xf32>
    %c4_i32_23 = arith.constant 4 : i32
    %50 = tpu.dynamic_rotate %47 by %c4_i32_23 dim 1 : vector<16x128xf32>, i32 -> vector<16x128xf32>
    %51 = arith.maximumf %49, %50 : vector<16x128xf32>
    %c3_i32_24 = arith.constant 3 : i32
    %52 = tpu.dynamic_rotate %47 by %c3_i32_24 dim 1 : vector<16x128xf32>, i32 -> vector<16x128xf32>
    %53 = arith.maximumf %51, %52 : vector<16x128xf32>
    %c5 = arith.constant 5 : index
    %c0_25 = arith.constant 0 : index
    %54 = vector.load %arg3[%c5, %c0_25] : memref<24x128xf32, #tpu.memory_space<vmem>>, vector<16x128xf32>
    %c5_i32_26 = arith.constant 5 : i32
    %55 = tpu.dynamic_rotate %54 by %c5_i32_26 dim 1 : vector<16x128xf32>, i32 -> vector<16x128xf32>
    %56 = arith.maximumf %53, %55 : vector<16x128xf32>
    %c4_i32_27 = arith.constant 4 : i32
    %57 = tpu.dynamic_rotate %54 by %c4_i32_27 dim 1 : vector<16x128xf32>, i32 -> vector<16x128xf32>
    %58 = arith.maximumf %56, %57 : vector<16x128xf32>
    %c3_i32_28 = arith.constant 3 : i32
    %59 = tpu.dynamic_rotate %54 by %c3_i32_28 dim 1 : vector<16x128xf32>, i32 -> vector<16x128xf32>
    %60 = arith.maximumf %58, %59 : vector<16x128xf32>
    %cst_29 = arith.constant 0.000000e+00 : f32
    %61 = vector.broadcast %cst_29 : f32 to vector<16x128xf32>
    %62 = arith.select %15, %60, %61 : vector<16x128xi1>, vector<16x128xf32>
    %cst_30 = arith.constant 0.000000e+00 : f32
    %63 = vector.broadcast %cst_30 : f32 to vector<40x128xf32>
    %c0_31 = arith.constant 0 : index
    %c0_32 = arith.constant 0 : index
    %64 = vector.load %arg4[%c0_31, %c0_32] : memref<40x128xf32, #tpu.memory_space<vmem>>, vector<40x128xf32>
    tpu.vector_store %arg4[%c0_31, %c0_32], %63 {strides = array<i32>} : memref<40x128xf32, #tpu.memory_space<vmem>>, vector<40x128xf32>,
    %c8_33 = arith.constant 8 : index
    %c0_34 = arith.constant 0 : index
    %65 = vector.load %arg4[%c8_33, %c0_34] : memref<40x128xf32, #tpu.memory_space<vmem>>, vector<16x128xf32>
    tpu.vector_store %arg4[%c8_33, %c0_34], %62 {strides = array<i32>} : memref<40x128xf32, #tpu.memory_space<vmem>>, vector<16x128xf32>,
    %c13 = arith.constant 13 : index
    %c0_35 = arith.constant 0 : index
    %66 = vector.load %arg1[%c13, %c0_35] : memref<16x128xf32, #tpu.memory_space<vmem>>, vector<1x128xf32>
    %67 = vector.shape_cast %66 : vector<1x128xf32> to vector<1x128xf32>
    %68 = vector.broadcast %67 : vector<1x128xf32> to vector<32x128xf32>
    %c2_36 = arith.constant 2 : index
    %c0_37 = arith.constant 0 : index
    %69 = vector.load %arg4[%c2_36, %c0_37] : memref<40x128xf32, #tpu.memory_space<vmem>>, vector<32x128xf32>
    %c6_i32 = arith.constant 6 : i32
    %70 = tpu.dynamic_rotate %69 by %c6_i32 dim 1 : vector<32x128xf32>, i32 -> vector<32x128xf32>
    %c4_38 = arith.constant 4 : index
    %c0_39 = arith.constant 0 : index
    %71 = vector.load %arg1[%c4_38, %c0_39] : memref<16x128xf32, #tpu.memory_space<vmem>>, vector<1x128xf32>
    %72 = vector.broadcast %71 : vector<1x128xf32> to vector<32x128xf32>
    %73 = arith.mulf %72, %70 : vector<32x128xf32>
    %74 = arith.addf %68, %73 : vector<32x128xf32>
    %c5_i32_40 = arith.constant 5 : i32
    %75 = tpu.dynamic_rotate %69 by %c5_i32_40 dim 1 : vector<32x128xf32>, i32 -> vector<32x128xf32>
    %c5_41 = arith.constant 5 : index
    %c0_42 = arith.constant 0 : index
    %76 = vector.load %arg1[%c5_41, %c0_42] : memref<16x128xf32, #tpu.memory_space<vmem>>, vector<1x128xf32>
    %77 = vector.broadcast %76 : vector<1x128xf32> to vector<32x128xf32>
    %78 = arith.mulf %77, %75 : vector<32x128xf32>
    %79 = arith.addf %74, %78 : vector<32x128xf32>
    %c4_i32_43 = arith.constant 4 : i32
    %80 = tpu.dynamic_rotate %69 by %c4_i32_43 dim 1 : vector<32x128xf32>, i32 -> vector<32x128xf32>
    %c6 = arith.constant 6 : index
    %c0_44 = arith.constant 0 : index
    %81 = vector.load %arg1[%c6, %c0_44] : memref<16x128xf32, #tpu.memory_space<vmem>>, vector<1x128xf32>
    %82 = vector.broadcast %81 : vector<1x128xf32> to vector<32x128xf32>
    %83 = arith.mulf %82, %80 : vector<32x128xf32>
    %84 = arith.addf %79, %83 : vector<32x128xf32>
    %c3_45 = arith.constant 3 : index
    %c0_46 = arith.constant 0 : index
    %85 = vector.load %arg4[%c3_45, %c0_46] : memref<40x128xf32, #tpu.memory_space<vmem>>, vector<32x128xf32>
    %c6_i32_47 = arith.constant 6 : i32
    %86 = tpu.dynamic_rotate %85 by %c6_i32_47 dim 1 : vector<32x128xf32>, i32 -> vector<32x128xf32>
    %c7 = arith.constant 7 : index
    %c0_48 = arith.constant 0 : index
    %87 = vector.load %arg1[%c7, %c0_48] : memref<16x128xf32, #tpu.memory_space<vmem>>, vector<1x128xf32>
    %88 = vector.broadcast %87 : vector<1x128xf32> to vector<32x128xf32>
    %89 = arith.mulf %88, %86 : vector<32x128xf32>
    %90 = arith.addf %84, %89 : vector<32x128xf32>
    %c5_i32_49 = arith.constant 5 : i32
    %91 = tpu.dynamic_rotate %85 by %c5_i32_49 dim 1 : vector<32x128xf32>, i32 -> vector<32x128xf32>
    %c8_50 = arith.constant 8 : index
    %c0_51 = arith.constant 0 : index
    %92 = vector.load %arg1[%c8_50, %c0_51] : memref<16x128xf32, #tpu.memory_space<vmem>>, vector<1x128xf32>
    %93 = vector.broadcast %92 : vector<1x128xf32> to vector<32x128xf32>
    %94 = arith.mulf %93, %91 : vector<32x128xf32>
    %95 = arith.addf %90, %94 : vector<32x128xf32>
    %c4_i32_52 = arith.constant 4 : i32
    %96 = tpu.dynamic_rotate %85 by %c4_i32_52 dim 1 : vector<32x128xf32>, i32 -> vector<32x128xf32>
    %c9 = arith.constant 9 : index
    %c0_53 = arith.constant 0 : index
    %97 = vector.load %arg1[%c9, %c0_53] : memref<16x128xf32, #tpu.memory_space<vmem>>, vector<1x128xf32>
    %98 = vector.broadcast %97 : vector<1x128xf32> to vector<32x128xf32>
    %99 = arith.mulf %98, %96 : vector<32x128xf32>
    %100 = arith.addf %95, %99 : vector<32x128xf32>
    %c4_54 = arith.constant 4 : index
    %c0_55 = arith.constant 0 : index
    %101 = vector.load %arg4[%c4_54, %c0_55] : memref<40x128xf32, #tpu.memory_space<vmem>>, vector<32x128xf32>
    %c6_i32_56 = arith.constant 6 : i32
    %102 = tpu.dynamic_rotate %101 by %c6_i32_56 dim 1 : vector<32x128xf32>, i32 -> vector<32x128xf32>
    %c10 = arith.constant 10 : index
    %c0_57 = arith.constant 0 : index
    %103 = vector.load %arg1[%c10, %c0_57] : memref<16x128xf32, #tpu.memory_space<vmem>>, vector<1x128xf32>
    %104 = vector.broadcast %103 : vector<1x128xf32> to vector<32x128xf32>
    %105 = arith.mulf %104, %102 : vector<32x128xf32>
    %106 = arith.addf %100, %105 : vector<32x128xf32>
    %c5_i32_58 = arith.constant 5 : i32
    %107 = tpu.dynamic_rotate %101 by %c5_i32_58 dim 1 : vector<32x128xf32>, i32 -> vector<32x128xf32>
    %c11 = arith.constant 11 : index
    %c0_59 = arith.constant 0 : index
    %108 = vector.load %arg1[%c11, %c0_59] : memref<16x128xf32, #tpu.memory_space<vmem>>, vector<1x128xf32>
    %109 = vector.broadcast %108 : vector<1x128xf32> to vector<32x128xf32>
    %110 = arith.mulf %109, %107 : vector<32x128xf32>
    %111 = arith.addf %106, %110 : vector<32x128xf32>
    %c4_i32_60 = arith.constant 4 : i32
    %112 = tpu.dynamic_rotate %101 by %c4_i32_60 dim 1 : vector<32x128xf32>, i32 -> vector<32x128xf32>
    %c12 = arith.constant 12 : index
    %c0_61 = arith.constant 0 : index
    %113 = vector.load %arg1[%c12, %c0_61] : memref<16x128xf32, #tpu.memory_space<vmem>>, vector<1x128xf32>
    %114 = vector.broadcast %113 : vector<1x128xf32> to vector<32x128xf32>
    %115 = arith.mulf %114, %112 : vector<32x128xf32>
    %116 = arith.addf %111, %115 : vector<32x128xf32>
    %c96_i32_62 = arith.constant 96 : i32
    %117 = tpu.dynamic_rotate %116 by %c96_i32_62 dim 1 : vector<32x128xf32>, i32 -> vector<32x128xf32>
    %118 = arith.addf %116, %117 : vector<32x128xf32>
    %c64_i32 = arith.constant 64 : i32
    %119 = tpu.dynamic_rotate %116 by %c64_i32 dim 1 : vector<32x128xf32>, i32 -> vector<32x128xf32>
    %120 = arith.addf %118, %119 : vector<32x128xf32>
    %c0_63 = arith.constant 0 : index
    %c0_64 = arith.constant 0 : index
    %121 = vector.load %arg2[%c0_63, %c0_64] : memref<32x128xf32, #tpu.memory_space<vmem>>, vector<32x128xf32>
    tpu.vector_store %arg2[%c0_63, %c0_64], %120 {strides = array<i32>} : memref<32x128xf32, #tpu.memory_space<vmem>>, vector<32x128xf32>,
    return
  }
}

</mosaic_0001>

<llo_original>
// kernel: _model1_forward_jit.1
$region0: #{_model1_forward_jit.1}
  #allocation0 [shape = 'u32[]', space=smem, size = 0x4, offset = 0x4, fixed_abs, tag = 'smem constant byte address 0x4 - core index']
  #allocation1 [shape = 'u32[144,128]{1,0:T(1,128)}', space=vmem, size = 0x12000, scoped, tag = 'internal scratch']
  #allocation2 [shape = 'f32[24,128]{1,0:T(8,128)}', space=vmem, size = 0x3000, scoped, tag = 'scratch operand']
  #allocation3 [shape = 'f32[40,128]{1,0:T(8,128)}', space=vmem, size = 0x5000, scoped, tag = 'scratch operand']
  %s0 = inlined_call_operand.vmem [shape: f32[3,8,128], index: 0, kind: input, shape index: {}]
  %s1 = inlined_call_operand.vmem [shape: f32[16,128], index: 1, kind: input, shape index: {}]
  %s2 = inlined_call_operand.vmem [shape: f32[32,128], index: 2, kind: output, shape index: {}]
  %s3 = sld [smem:[#allocation0]]
  $region18: #{_model1_forward_jit.1} parent=0
    _
  %s5 = ssub.s32 1, %s3
  %s6 = scalar_select 0, %s5, %s3
  // Predicated region
  $region2: #{_model1_forward_jit.1} parent=0 // pred_check
    _
  $region3: #{_model1_forward_jit.1} parent=0 // pred_check_branch
    %8 = sbr.rel (0) target = $region5
  $region4: #{_model1_forward_jit.1} parent=0 // pred_region
    _
  $region5: #{_model1_forward_jit.1} parent=0 // pred_fallthru
    _
  // Predicated region
  $region6: #{_model1_forward_jit.1} parent=0 // pred_check
    _
  $region7: #{_model1_forward_jit.1} parent=0 // pred_check_branch
    %10 = sbr.rel (0) target = $region9
  $region8: #{_model1_forward_jit.1} parent=0 // pred_region
    _
  $region9: #{_model1_forward_jit.1} parent=0 // pred_fallthru
    _
  %v11 = vlaneseq
  %v12 = vand.u32 %v11, 127
  %v13 = vand.u32 %v12, 31
  %vm14 = vcmp.lt.s32.totalorder %v13, 8
  %vm15 = vcmp.lt.s32.totalorder %v12, 96
  %vm16 = vmand %vm14, %vm15
  %vm17 = vcmp.lt.s32.totalorder %v13, 16
  %vm18 = vmand %vm17, %vm15
  %v19 = vld [vmem:[%s1] sm:$0x1]
  %v20 = vld [vmem:[%s0] sm:$0xff]
  %v21 = vlaneseq
  %v22 = vshrl.u32 %v21, 7
  %v23 = vsub.s32 0, %v22
  %v24 = vrot.slane %v19, %v23
  %v25 = vmul.f32 %v24, %v20
  %v26 = vld [vmem:[%s1 + $0x1] sm:$0x1]
  %s27 = scalar_lea.vmem %s0, 8
  %v28 = vld [vmem:[%s27] sm:$0xff]
  %v29 = vlaneseq
  %v30 = vshrl.u32 %v29, 7
  %v31 = vsub.s32 0, %v30
  %v32 = vrot.slane %v26, %v31
  %v33 = vmul.f32 %v32, %v28
  %v34 = vadd.f32 %v25, %v33
  %v35 = vld [vmem:[%s1 + $0x2] sm:$0x1]
  %s36 = scalar_lea.vmem %s0, 16
  %v37 = vld [vmem:[%s36] sm:$0xff]
  %v38 = vlaneseq
  %v39 = vshrl.u32 %v38, 7
  %v40 = vsub.s32 0, %v39
  %v41 = vrot.slane %v35, %v40
  %v42 = vmul.f32 %v41, %v37
  %v43 = vadd.f32 %v34, %v42
  %v44 = vld [vmem:[%s1 + $0x3] sm:$0x1]
  %v45 = vlaneseq
  %v46 = vshrl.u32 %v45, 7
  %v47 = vsub.s32 0, %v46
  %v48 = vrot.slane %v44, %v47
  %v49 = vadd.f32 %v43, %v48
  %v50 = vsel %vm16, %v49, -inf
  %51 = vst [vmem:[#allocation2] sm:$0xff] -inf
  %52 = vst [vmem:[#allocation2 + $0x8] sm:$0xff] -inf
  %53 = vst [vmem:[#allocation2 + $0x10] sm:$0xff] -inf
  %54 = vst [vmem:[#allocation2 + $0x8] sm:$0xff] %v50
  %v55 = vld [vmem:[#allocation2 + $0x3] sm:$0xff]
  %v56 = vld [vmem:[#allocation2 + $0xb] sm:$0xff]
  %57 = vrot.lane.b32.xlu0 %v55, 5
  %v58 = vpop.permute.xlu0 %57
  %59 = vrot.lane.b32.xlu0 %v56, 5
  %v60 = vpop.permute.xlu0 %59
  %61 = vrot.lane.b32.xlu0 %v55, 4
  %v62 = vpop.permute.xlu0 %61
  %63 = vrot.lane.b32.xlu0 %v56, 4
  %v64 = vpop.permute.xlu0 %63
  %v65 = vmax.f32 %v58, %v62
  %v66 = vmax.f32 %v60, %v64
  %67 = vrot.lane.b32.xlu0 %v55, 3
  %v68 = vpop.permute.xlu0 %67
  %69 = vrot.lane.b32.xlu0 %v56, 3
  %v70 = vpop.permute.xlu0 %69
  %v71 = vmax.f32 %v65, %v68
  %v72 = vmax.f32 %v66, %v70
  %v73 = vld [vmem:[#allocation2 + $0x4] sm:$0xff]
  %v74 = vld [vmem:[#allocation2 + $0xc] sm:$0xff]
  %75 = vrot.lane.b32.xlu0 %v73, 5
  %v76 = vpop.permute.xlu0 %75
  %77 = vrot.lane.b32.xlu0 %v74, 5
  %v78 = vpop.permute.xlu0 %77
  %v79 = vmax.f32 %v71, %v76
  %v80 = vmax.f32 %v72, %v78
  %81 = vrot.lane.b32.xlu0 %v73, 4
  %v82 = vpop.permute.xlu0 %81
  %83 = vrot.lane.b32.xlu0 %v74, 4
  %v84 = vpop.permute.xlu0 %83
  %v85 = vmax.f32 %v79, %v82
  %v86 = vmax.f32 %v80, %v84
  %87 = vrot.lane.b32.xlu0 %v73, 3
  %v88 = vpop.permute.xlu0 %87
  %89 = vrot.lane.b32.xlu0 %v74, 3
  %v90 = vpop.permute.xlu0 %89
  %v91 = vmax.f32 %v85, %v88
  %v92 = vmax.f32 %v86, %v90
  %v93 = vld [vmem:[#allocation2 + $0x5] sm:$0xff]
  %v94 = vld [vmem:[#allocation2 + $0xd] sm:$0xff]
  %95 = vrot.lane.b32.xlu0 %v93, 5
  %v96 = vpop.permute.xlu0 %95
  %97 = vrot.lane.b32.xlu0 %v94, 5
  %v98 = vpop.permute.xlu0 %97
  %v99 = vmax.f32 %v91, %v96
  %v100 = vmax.f32 %v92, %v98
  %101 = vrot.lane.b32.xlu0 %v93, 4
  %v102 = vpop.permute.xlu0 %101
  %103 = vrot.lane.b32.xlu0 %v94, 4
  %v104 = vpop.permute.xlu0 %103
  %v105 = vmax.f32 %v99, %v102
  %v106 = vmax.f32 %v100, %v104
  %107 = vrot.lane.b32.xlu0 %v93, 3
  %v108 = vpop.permute.xlu0 %107
  %109 = vrot.lane.b32.xlu0 %v94, 3
  %v110 = vpop.permute.xlu0 %109
  %v111 = vmax.f32 %v105, %v108
  %v112 = vmax.f32 %v106, %v110
  %v113 = vsel %vm18, %v111, 0.0
  %v114 = vsel %vm18, %v112, 0.0
  %115 = vst [vmem:[#allocation3] sm:$0xff] 0.0
  %116 = vst [vmem:[#allocation3 + $0x8] sm:$0xff] 0.0
  %117 = vst [vmem:[#allocation3 + $0x10] sm:$0xff] 0.0
  %118 = vst [vmem:[#allocation3 + $0x18] sm:$0xff] 0.0
  %119 = vst [vmem:[#allocation3 + $0x20] sm:$0xff] 0.0
  %120 = vst [vmem:[#allocation3 + $0x8] sm:$0xff] %v113
  %121 = vst [vmem:[#allocation3 + $0x10] sm:$0xff] %v114
  %v122 = vld [vmem:[%s1 + $0xd] sm:$0x1]
  %v123 = vlaneseq
  %v124 = vshrl.u32 %v123, 7
  %v125 = vsub.s32 0, %v124
  %v126 = vrot.slane %v122, %v125
  %v127 = vld [vmem:[#allocation3 + $0x2] sm:$0xff]
  %v128 = vld [vmem:[#allocation3 + $0xa] sm:$0xff]
  %v129 = vld [vmem:[#allocation3 + $0x12] sm:$0xff]
  %v130 = vld [vmem:[#allocation3 + $0x1a] sm:$0xff]
  %131 = vrot.lane.b32.xlu0 %v127, 6
  %v132 = vpop.permute.xlu0 %131
  %133 = vrot.lane.b32.xlu0 %v128, 6
  %v134 = vpop.permute.xlu0 %133
  %135 = vrot.lane.b32.xlu0 %v129, 6
  %v136 = vpop.permute.xlu0 %135
  %137 = vrot.lane.b32.xlu0 %v130, 6
  %v138 = vpop.permute.xlu0 %137
  %v139 = vld [vmem:[%s1 + $0x4] sm:$0x1]
  %v140 = vlaneseq
  %v141 = vshrl.u32 %v140, 7
  %v142 = vsub.s32 0, %v141
  %v143 = vrot.slane %v139, %v142
  %v144 = vmul.f32 %v143, %v132
  %v145 = vmul.f32 %v143, %v134
  %v146 = vmul.f32 %v143, %v136
  %v147 = vmul.f32 %v143, %v138
  %v148 = vadd.f32 %v126, %v144
  %v149 = vadd.f32 %v126, %v145
  %v150 = vadd.f32 %v126, %v146
  %v151 = vadd.f32 %v126, %v147
  %152 = vrot.lane.b32.xlu0 %v127, 5
  %v153 = vpop.permute.xlu0 %152
  %154 = vrot.lane.b32.xlu0 %v128, 5
  %v155 = vpop.permute.xlu0 %154
  %156 = vrot.lane.b32.xlu0 %v129, 5
  %v157 = vpop.permute.xlu0 %156
  %158 = vrot.lane.b32.xlu0 %v130, 5
  %v159 = vpop.permute.xlu0 %158
  %v160 = vld [vmem:[%s1 + $0x5] sm:$0x1]
  %v161 = vlaneseq
  %v162 = vshrl.u32 %v161, 7
  %v163 = vsub.s32 0, %v162
  %v164 = vrot.slane %v160, %v163
  %v165 = vmul.f32 %v164, %v153
  %v166 = vmul.f32 %v164, %v155
  %v167 = vmul.f32 %v164, %v157
  %v168 = vmul.f32 %v164, %v159
  %v169 = vadd.f32 %v148, %v165
  %v170 = vadd.f32 %v149, %v166
  %v171 = vadd.f32 %v150, %v167
  %v172 = vadd.f32 %v151, %v168
  %173 = vrot.lane.b32.xlu0 %v127, 4
  %v174 = vpop.permute.xlu0 %173
  %175 = vrot.lane.b32.xlu0 %v128, 4
  %v176 = vpop.permute.xlu0 %175
  %177 = vrot.lane.b32.xlu0 %v129, 4
  %v178 = vpop.permute.xlu0 %177
  %179 = vrot.lane.b32.xlu0 %v130, 4
  %v180 = vpop.permute.xlu0 %179
  %v181 = vld [vmem:[%s1 + $0x6] sm:$0x1]
  %v182 = vlaneseq
  %v183 = vshrl.u32 %v182, 7
  %v184 = vsub.s32 0, %v183
  %v185 = vrot.slane %v181, %v184
  %v186 = vmul.f32 %v185, %v174
  %v187 = vmul.f32 %v185, %v176
  %v188 = vmul.f32 %v185, %v178
  %v189 = vmul.f32 %v185, %v180
  %v190 = vadd.f32 %v169, %v186
  %v191 = vadd.f32 %v170, %v187
  %v192 = vadd.f32 %v171, %v188
  %v193 = vadd.f32 %v172, %v189
  %v194 = vld [vmem:[#allocation3 + $0x3] sm:$0xff]
  %v195 = vld [vmem:[#allocation3 + $0xb] sm:$0xff]
  %v196 = vld [vmem:[#allocation3 + $0x13] sm:$0xff]
  %v197 = vld [vmem:[#allocation3 + $0x1b] sm:$0xff]
  %198 = vrot.lane.b32.xlu0 %v194, 6
  %v199 = vpop.permute.xlu0 %198
  %200 = vrot.lane.b32.xlu0 %v195, 6
  %v201 = vpop.permute.xlu0 %200
  %202 = vrot.lane.b32.xlu0 %v196, 6
  %v203 = vpop.permute.xlu0 %202
  %204 = vrot.lane.b32.xlu0 %v197, 6
  %v205 = vpop.permute.xlu0 %204
  %v206 = vld [vmem:[%s1 + $0x7] sm:$0x1]
  %v207 = vlaneseq
  %v208 = vshrl.u32 %v207, 7
  %v209 = vsub.s32 0, %v208
  %v210 = vrot.slane %v206, %v209
  %v211 = vmul.f32 %v210, %v199
  %v212 = vmul.f32 %v210, %v201
  %v213 = vmul.f32 %v210, %v203
  %v214 = vmul.f32 %v210, %v205
  %v215 = vadd.f32 %v190, %v211
  %v216 = vadd.f32 %v191, %v212
  %v217 = vadd.f32 %v192, %v213
  %v218 = vadd.f32 %v193, %v214
  %219 = vrot.lane.b32.xlu0 %v194, 5
  %v220 = vpop.permute.xlu0 %219
  %221 = vrot.lane.b32.xlu0 %v195, 5
  %v222 = vpop.permute.xlu0 %221
  %223 = vrot.lane.b32.xlu0 %v196, 5
  %v224 = vpop.permute.xlu0 %223
  %225 = vrot.lane.b32.xlu0 %v197, 5
  %v226 = vpop.permute.xlu0 %225
  %v227 = vld [vmem:[%s1 + $0x8] sm:$0x1]
  %v228 = vlaneseq
  %v229 = vshrl.u32 %v228, 7
  %v230 = vsub.s32 0, %v229
  %v231 = vrot.slane %v227, %v230
  %v232 = vmul.f32 %v231, %v220
  %v233 = vmul.f32 %v231, %v222
  %v234 = vmul.f32 %v231, %v224
  %v235 = vmul.f32 %v231, %v226
  %v236 = vadd.f32 %v215, %v232
  %v237 = vadd.f32 %v216, %v233
  %v238 = vadd.f32 %v217, %v234
  %v239 = vadd.f32 %v218, %v235
  %240 = vrot.lane.b32.xlu0 %v194, 4
  %v241 = vpop.permute.xlu0 %240
  %242 = vrot.lane.b32.xlu0 %v195, 4
  %v243 = vpop.permute.xlu0 %242
  %244 = vrot.lane.b32.xlu0 %v196, 4
  %v245 = vpop.permute.xlu0 %244
  %246 = vrot.lane.b32.xlu0 %v197, 4
  %v247 = vpop.permute.xlu0 %246
  %v248 = vld [vmem:[%s1 + $0x9] sm:$0x1]
  %v249 = vlaneseq
  %v250 = vshrl.u32 %v249, 7
  %v251 = vsub.s32 0, %v250
  %v252 = vrot.slane %v248, %v251
  %v253 = vmul.f32 %v252, %v241
  %v254 = vmul.f32 %v252, %v243
  %v255 = vmul.f32 %v252, %v245
  %v256 = vmul.f32 %v252, %v247
  %v257 = vadd.f32 %v236, %v253
  %v258 = vadd.f32 %v237, %v254
  %v259 = vadd.f32 %v238, %v255
  %v260 = vadd.f32 %v239, %v256
  %v261 = vld [vmem:[#allocation3 + $0x4] sm:$0xff]
  %v262 = vld [vmem:[#allocation3 + $0xc] sm:$0xff]
  %v263 = vld [vmem:[#allocation3 + $0x14] sm:$0xff]
  %v264 = vld [vmem:[#allocation3 + $0x1c] sm:$0xff]
  %265 = vrot.lane.b32.xlu0 %v261, 6
  %v266 = vpop.permute.xlu0 %265
  %267 = vrot.lane.b32.xlu0 %v262, 6
  %v268 = vpop.permute.xlu0 %267
  %269 = vrot.lane.b32.xlu0 %v263, 6
  %v270 = vpop.permute.xlu0 %269
  %271 = vrot.lane.b32.xlu0 %v264, 6
  %v272 = vpop.permute.xlu0 %271
  %v273 = vld [vmem:[%s1 + $0xa] sm:$0x1]
  %v274 = vlaneseq
  %v275 = vshrl.u32 %v274, 7
  %v276 = vsub.s32 0, %v275
  %v277 = vrot.slane %v273, %v276
  %v278 = vmul.f32 %v277, %v266
  %v279 = vmul.f32 %v277, %v268
  %v280 = vmul.f32 %v277, %v270
  %v281 = vmul.f32 %v277, %v272
  %v282 = vadd.f32 %v257, %v278
  %v283 = vadd.f32 %v258, %v279
  %v284 = vadd.f32 %v259, %v280
  %v285 = vadd.f32 %v260, %v281
  %286 = vrot.lane.b32.xlu0 %v261, 5
  %v287 = vpop.permute.xlu0 %286
  %288 = vrot.lane.b32.xlu0 %v262, 5
  %v289 = vpop.permute.xlu0 %288
  %290 = vrot.lane.b32.xlu0 %v263, 5
  %v291 = vpop.permute.xlu0 %290
  %292 = vrot.lane.b32.xlu0 %v264, 5
  %v293 = vpop.permute.xlu0 %292
  %v294 = vld [vmem:[%s1 + $0xb] sm:$0x1]
  %v295 = vlaneseq
  %v296 = vshrl.u32 %v295, 7
  %v297 = vsub.s32 0, %v296
  %v298 = vrot.slane %v294, %v297
  %v299 = vmul.f32 %v298, %v287
  %v300 = vmul.f32 %v298, %v289
  %v301 = vmul.f32 %v298, %v291
  %v302 = vmul.f32 %v298, %v293
  %v303 = vadd.f32 %v282, %v299
  %v304 = vadd.f32 %v283, %v300
  %v305 = vadd.f32 %v284, %v301
  %v306 = vadd.f32 %v285, %v302
  %307 = vrot.lane.b32.xlu0 %v261, 4
  %v308 = vpop.permute.xlu0 %307
  %309 = vrot.lane.b32.xlu0 %v262, 4
  %v310 = vpop.permute.xlu0 %309
  %311 = vrot.lane.b32.xlu0 %v263, 4
  %v312 = vpop.permute.xlu0 %311
  %313 = vrot.lane.b32.xlu0 %v264, 4
  %v314 = vpop.permute.xlu0 %313
  %v315 = vld [vmem:[%s1 + $0xc] sm:$0x1]
  %v316 = vlaneseq
  %v317 = vshrl.u32 %v316, 7
  %v318 = vsub.s32 0, %v317
  %v319 = vrot.slane %v315, %v318
  %v320 = vmul.f32 %v319, %v308
  %v321 = vmul.f32 %v319, %v310
  %v322 = vmul.f32 %v319, %v312
  %v323 = vmul.f32 %v319, %v314
  %v324 = vadd.f32 %v303, %v320
  %v325 = vadd.f32 %v304, %v321
  %v326 = vadd.f32 %v305, %v322
  %v327 = vadd.f32 %v306, %v323
  %328 = vrot.lane.b32.xlu0 %v324, 96
  %v329 = vpop.permute.xlu0 %328
  %330 = vrot.lane.b32.xlu0 %v325, 96
  %v331 = vpop.permute.xlu0 %330
  %332 = vrot.lane.b32.xlu0 %v326, 96
  %v333 = vpop.permute.xlu0 %332
  %334 = vrot.lane.b32.xlu0 %v327, 96
  %v335 = vpop.permute.xlu0 %334
  %v336 = vadd.f32 %v324, %v329
  %v337 = vadd.f32 %v325, %v331
  %v338 = vadd.f32 %v326, %v333
  %v339 = vadd.f32 %v327, %v335
  %340 = vrot.lane.b32.xlu0 %v324, 64
  %v341 = vpop.permute.xlu0 %340
  %342 = vrot.lane.b32.xlu0 %v325, 64
  %v343 = vpop.permute.xlu0 %342
  %344 = vrot.lane.b32.xlu0 %v326, 64
  %v345 = vpop.permute.xlu0 %344
  %346 = vrot.lane.b32.xlu0 %v327, 64
  %v347 = vpop.permute.xlu0 %346
  %v348 = vadd.f32 %v336, %v341
  %v349 = vadd.f32 %v337, %v343
  %v350 = vadd.f32 %v338, %v345
  %v351 = vadd.f32 %v339, %v347
  %352 = vst [vmem:[%s2] sm:$0xff] %v348
  %353 = vst [vmem:[%s2 + $0x8] sm:$0xff] %v349
  %354 = vst [vmem:[%s2 + $0x10] sm:$0xff] %v350
  %355 = vst [vmem:[%s2 + $0x18] sm:$0xff] %v351
  // Predicated region
  $region10: #{_model1_forward_jit.1} parent=0 // pred_check
    _
  $region11: #{_model1_forward_jit.1} parent=0 // pred_check_branch
    %357 = sbr.rel (0) target = $region13
  $region12: #{_model1_forward_jit.1} parent=0 // pred_region
    _
  $region13: #{_model1_forward_jit.1} parent=0 // pred_fallthru
    _
  // Predicated region
  $region14: #{_model1_forward_jit.1} parent=0 // pred_check
    _
  $region15: #{_model1_forward_jit.1} parent=0 // pred_check_branch
    %359 = sbr.rel (0) target = $region17
  $region16: #{_model1_forward_jit.1} parent=0 // pred_region
    _
  $region17: #{_model1_forward_jit.1} parent=0 // pred_fallthru
    _

</llo_original>
